<compile_context>
chip_gen: v5e
topology: v5e:2x2
jax: 0.10.0
libtpu: 0.0.40
codegen_flags: <defaults>
</compile_context>

<pallas_src>
import jax
import jax.numpy as jnp
from jax.experimental import pallas as pl
from jax.experimental.pallas import tpu as pltpu

INPUT_DIM = 42      # LSTMModel(42, 1)
HIDDEN = 64
OUTPUT_DIM = 1
PAD_IN = 128        # features zero-padded 42 -> 128


def _round_up(v, m):
    return ((v + m - 1) // m) * m


def _sigmoid(x):
    # exact identity; avoids a possible exp + reciprocal (2 EUP ops) lowering
    return 0.5 * (jnp.tanh(0.5 * x) + 1.0)


def maml_lstm_kernel(x_ref, w0_ref, b0_ref, w1_ref, b1_ref,
                     w_fc_ref, b_fc_ref, out_ref):
    """One batch tile: folded-embedding layer-0 gates -> layer-1 gates -> fc+sigmoid."""
    x = x_ref[...]                                                    # (tb, 128)

    # Layer 0: embedding Linear folded into the gate matmul; h0 = c0 = 0 so the
    # recurrent term and the f-gate vanish.  Gate column layout: [ i | g | o ].
    g0 = jnp.dot(x, w0_ref[...], preferred_element_type=jnp.float32) + b0_ref[...]
    i0 = _sigmoid(g0[:, 0:HIDDEN])
    c0 = i0 * jnp.tanh(g0[:, HIDDEN:2 * HIDDEN])
    h1 = _sigmoid(g0[:, 2 * HIDDEN:3 * HIDDEN]) * jnp.tanh(c0)        # (tb, 64)

    # Layer 1: same single-timestep / zero-state simplification.
    g1 = jnp.dot(h1, w1_ref[...], preferred_element_type=jnp.float32) + b1_ref[...]
    i1 = _sigmoid(g1[:, 0:HIDDEN])
    c1 = i1 * jnp.tanh(g1[:, HIDDEN:2 * HIDDEN])
    h2 = _sigmoid(g1[:, 2 * HIDDEN:3 * HIDDEN]) * jnp.tanh(c1)        # (tb, 64)

    # fc_out: Linear(64 -> 1) + sigmoid.  The (tb, 1) output block is lane-sparse
    # (masked stores) but its byte volume is negligible here; accepted knowingly.
    logits = (jnp.dot(h2, w_fc_ref[...], preferred_element_type=jnp.float32)
              + b_fc_ref[...])                                        # (tb, 1)
    out_ref[...] = _sigmoid(logits)


def init_params(key):
    """Deterministic parameters matching the PyTorch module shapes.
    Weights stored pre-transposed so math is `x @ W_t` (PyTorch gate order i,f,g,o)."""
    ks = jax.random.split(key, 11)
    u = lambda k, shape, scale: jax.random.uniform(
        k, shape, jnp.float32, -scale, scale)

    s_emb = 1.0 / (INPUT_DIM ** 0.5)
    s_h = 1.0 / (HIDDEN ** 0.5)

    w_emb = u(ks[0], (INPUT_DIM, HIDDEN), s_emb)          # Linear(42,64).weight.T
    b_emb = u(ks[1], (1, HIDDEN), s_emb)                  # Linear(42,64).bias

    w_ih0 = u(ks[2], (HIDDEN, 4 * HIDDEN), s_h)           # weight_ih_l0.T
    w_hh0 = u(ks[3], (HIDDEN, 4 * HIDDEN), s_h)           # weight_hh_l0.T (unused: h0=0)
    b0 = (u(ks[4], (1, 4 * HIDDEN), s_h)
          + u(ks[5], (1, 4 * HIDDEN), s_h))               # bias_ih_l0 + bias_hh_l0

    w_ih1 = u(ks[6], (HIDDEN, 4 * HIDDEN), s_h)           # weight_ih_l1.T
    w_hh1 = u(ks[7], (HIDDEN, 4 * HIDDEN), s_h)           # weight_hh_l1.T (unused: h0=0)
    b1 = (u(ks[8], (1, 4 * HIDDEN), s_h)
          + u(ks[9], (1, 4 * HIDDEN), s_h))               # bias_ih_l1 + bias_hh_l1

    kf1, kf2 = jax.random.split(ks[10])
    w_fc = u(kf1, (HIDDEN, OUTPUT_DIM), s_h)              # fc_out.weight.T
    b_fc = u(kf2, (1, OUTPUT_DIM), s_h)                   # fc_out.bias

    return (w_emb, b_emb, w_ih0, w_hh0, b0, w_ih1, w_hh1, b1, w_fc, b_fc)


def fold_params(params):
    """Offline (exact) algebraic folding into kernel-ready parameters."""
    (w_emb, b_emb, w_ih0, w_hh0, b0, w_ih1, w_hh1, b1, w_fc, b_fc) = params
    del w_hh0, w_hh1  # recurrent weights never used: single step, zero state

    # Keep only the i, g, o gate columns (PyTorch gate order is i, f, g, o).
    igo = jnp.concatenate([jnp.arange(0, HIDDEN),
                           jnp.arange(2 * HIDDEN, 4 * HIDDEN)])
    w_ih0_igo = w_ih0[:, igo]                              # (64, 192)
    b0_igo = b0[:, igo]                                    # (1, 192)
    w1 = w_ih1[:, igo]                                     # (64, 192)
    b1f = b1[:, igo]                                       # (1, 192)

    # Fold feature_embedding Linear into layer-0 gate matmul, pad rows 42 -> 128.
    w0 = w_emb @ w_ih0_igo                                 # (42, 192)
    w0 = jnp.zeros((PAD_IN, 3 * HIDDEN), jnp.float32).at[:INPUT_DIM, :].set(w0)
    b0f = b_emb @ w_ih0_igo + b0_igo                       # (1, 192)

    return (w0, b0f, w1, b1f, w_fc, b_fc)


def maml_forward(x, kernel_params, *, tile_b=512):
    """MAML(LSTMModel(42, 1)).forward(x); x: (B, 42) float32 -> (B,) float32."""
    (w0, b0f, w1, b1f, w_fc, b_fc) = kernel_params
    B = x.shape[0]
    tb = min(tile_b, _round_up(B, 8))      # batch tile, multiple of 8
    Bp = _round_up(B, tb)                  # padded batch, multiple of tb

    # Zero-pad batch (to a whole number of tiles) and features (42 -> 128).
    xp = jnp.zeros((Bp, PAD_IN), jnp.float32).at[:B, :INPUT_DIM].set(x)

    def resident(shape):                   # weights/biases: VMEM-resident, never re-DMA'd
        return pl.BlockSpec(shape, lambda i: (0, 0))

    out = pl.pallas_call(
        maml_lstm_kernel,
        out_shape=jax.ShapeDtypeStruct((Bp, OUTPUT_DIM), jnp.float32),
        grid=(Bp // tb,),
        in_specs=[
            pl.BlockSpec((tb, PAD_IN), lambda i: (i, 0)),   # x batch tile
            resident(w0.shape), resident(b0f.shape),
            resident(w1.shape), resident(b1f.shape),
            resident(w_fc.shape), resident(b_fc.shape),
        ],
        out_specs=pl.BlockSpec((tb, OUTPUT_DIM), lambda i: (i, 0)),
        compiler_params=pltpu.CompilerParams(
            dimension_semantics=("parallel",)),   # v7x: shard tiles over 2 TCs
    )(xp, w0, b0f, w1, b1f, w_fc, b_fc)

    return out[:B, 0]   # torch `.squeeze()` on (B, 1) -> (B,)


def _reference_forward(x, params):
    """Pure-JAX reference with full PyTorch LSTM semantics (f-gate, W_hh kept)."""
    (w_emb, b_emb, w_ih0, w_hh0, b0, w_ih1, w_hh1, b1, w_fc, b_fc) = params
    emb = x @ w_emb + b_emb
    z = jnp.zeros((x.shape[0], HIDDEN), jnp.float32)

    def cell(inp, h_prev, c_prev, w_ih_t, w_hh_t, b):
        g = inp @ w_ih_t + h_prev @ w_hh_t + b
        i = jax.nn.sigmoid(g[:, :HIDDEN])
        f = jax.nn.sigmoid(g[:, HIDDEN:2 * HIDDEN])
        gg = jnp.tanh(g[:, 2 * HIDDEN:3 * HIDDEN])
        o = jax.nn.sigmoid(g[:, 3 * HIDDEN:])
        c = f * c_prev + i * gg
        return o * jnp.tanh(c), c

    h1, _ = cell(emb, z, z, w_ih0, w_hh0, b0)
    h2, _ = cell(h1, z, z, w_ih1, w_hh1, b1)
    return jax.nn.sigmoid(h2 @ w_fc + b_fc).squeeze(-1)


if __name__ == "__main__":
    key = jax.random.PRNGKey(0)
    k_x, k_p = jax.random.split(key)

    B = 8
    x = jax.random.normal(k_x, (B, INPUT_DIM), jnp.float32)
    params = init_params(k_p)
    kparams = fold_params(params)

    y = jax.block_until_ready(maml_forward(x, kparams))

    y_ref = _reference_forward(x, params)
    assert y.shape == (B,)
    assert jnp.allclose(y, y_ref, atol=1e-4, rtol=1e-4), \
        float(jnp.max(jnp.abs(y - y_ref)))

    print("KERNEL_OK")
</pallas_src>

<mosaic_0001>
module attributes {stable_mosaic.version = 11 : i64} {
  func.func @maml_lstm_kernel(%arg0: i32, %arg1: memref<8x128xf32, #tpu.memory_space<vmem>>, %arg2: memref<128x192xf32, #tpu.memory_space<vmem>>, %arg3: memref<1x192xf32, #tpu.memory_space<vmem>>, %arg4: memref<64x192xf32, #tpu.memory_space<vmem>>, %arg5: memref<1x192xf32, #tpu.memory_space<vmem>>, %arg6: memref<64x1xf32, #tpu.memory_space<vmem>>, %arg7: memref<1x1xf32, #tpu.memory_space<vmem>>, %arg8: memref<8x1xf32, #tpu.memory_space<vmem>>) attributes {dimension_semantics = [#tpu.dimension_semantics<parallel>], iteration_bounds = array<i64: 1>, scalar_prefetch = 0 : i64, scratch_operands = 0 : i64, tpu.core_type = #tpu.core_type<tc>, window_params = [{transform_indices = @transform_0, window_bounds = array<i64: 8, 128>}, {pipeline_mode = #tpu.pipeline_mode<synchronous>, transform_indices = @transform_1, window_bounds = array<i64: 128, 192>}, {pipeline_mode = #tpu.pipeline_mode<synchronous>, transform_indices = @transform_2, window_bounds = array<i64: 1, 192>}, {pipeline_mode = #tpu.pipeline_mode<synchronous>, transform_indices = @transform_3, window_bounds = array<i64: 64, 192>}, {pipeline_mode = #tpu.pipeline_mode<synchronous>, transform_indices = @transform_4, window_bounds = array<i64: 1, 192>}, {pipeline_mode = #tpu.pipeline_mode<synchronous>, transform_indices = @transform_5, window_bounds = array<i64: 64, 1>}, {pipeline_mode = #tpu.pipeline_mode<synchronous>, transform_indices = @transform_6, window_bounds = array<i64: 1, 1>}, {transform_indices = @transform_7, window_bounds = array<i64: 8, 1>}]} {
    %c0 = arith.constant 0 : index
    %c0_0 = arith.constant 0 : index
    %0 = vector.load %arg1[%c0, %c0_0] : memref<8x128xf32, #tpu.memory_space<vmem>>, vector<8x128xf32>
    %c0_1 = arith.constant 0 : index
    %c0_2 = arith.constant 0 : index
    %1 = vector.load %arg2[%c0_1, %c0_2] : memref<128x192xf32, #tpu.memory_space<vmem>>, vector<128x192xf32>
    %cst = arith.constant dense<0.000000e+00> : vector<8x192xf32>
    %2 = tpu.matmul %0, %1, %cst {dimension_numbers = #tpu.dot_dimension_numbers<[1], [0], [0], [1], [0, 0, 1, 1], [], []>} : vector<8x128xf32>, vector<128x192xf32>, vector<8x192xf32> -> vector<8x192xf32>
    %c0_3 = arith.constant 0 : index
    %c0_4 = arith.constant 0 : index
    %3 = vector.load %arg3[%c0_3, %c0_4] : memref<1x192xf32, #tpu.memory_space<vmem>>, vector<1x192xf32>
    %4 = vector.broadcast %3 : vector<1x192xf32> to vector<8x192xf32>
    %5 = arith.addf %2, %4 : vector<8x192xf32>
    %6 = vector.extract_strided_slice %5 {offsets = [0, 0], sizes = [8, 64], strides = [1, 1]} : vector<8x192xf32> to vector<8x64xf32>
    %cst_5 = arith.constant 5.000000e-01 : f32
    %7 = vector.broadcast %cst_5 : f32 to vector<8x64xf32>
    %8 = arith.mulf %7, %6 : vector<8x64xf32>
    %9 = math.tanh %8 : vector<8x64xf32>
    %cst_6 = arith.constant 1.000000e+00 : f32
    %10 = vector.broadcast %cst_6 : f32 to vector<8x64xf32>
    %11 = arith.addf %9, %10 : vector<8x64xf32>
    %cst_7 = arith.constant 5.000000e-01 : f32
    %12 = vector.broadcast %cst_7 : f32 to vector<8x64xf32>
    %13 = arith.mulf %12, %11 : vector<8x64xf32>
    %14 = vector.extract_strided_slice %5 {offsets = [0, 64], sizes = [8, 64], strides = [1, 1]} : vector<8x192xf32> to vector<8x64xf32>
    %15 = math.tanh %14 : vector<8x64xf32>
    %16 = arith.mulf %13, %15 : vector<8x64xf32>
    %17 = vector.extract_strided_slice %5 {offsets = [0, 128], sizes = [8, 64], strides = [1, 1]} : vector<8x192xf32> to vector<8x64xf32>
    %cst_8 = arith.constant 5.000000e-01 : f32
    %18 = vector.broadcast %cst_8 : f32 to vector<8x64xf32>
    %19 = arith.mulf %18, %17 : vector<8x64xf32>
    %20 = math.tanh %19 : vector<8x64xf32>
    %cst_9 = arith.constant 1.000000e+00 : f32
    %21 = vector.broadcast %cst_9 : f32 to vector<8x64xf32>
    %22 = arith.addf %20, %21 : vector<8x64xf32>
    %cst_10 = arith.constant 5.000000e-01 : f32
    %23 = vector.broadcast %cst_10 : f32 to vector<8x64xf32>
    %24 = arith.mulf %23, %22 : vector<8x64xf32>
    %25 = math.tanh %16 : vector<8x64xf32>
    %26 = arith.mulf %24, %25 : vector<8x64xf32>
    %c0_11 = arith.constant 0 : index
    %c0_12 = arith.constant 0 : index
    %27 = vector.load %arg4[%c0_11, %c0_12] : memref<64x192xf32, #tpu.memory_space<vmem>>, vector<64x192xf32>
    %cst_13 = arith.constant dense<0.000000e+00> : vector<8x192xf32>
    %28 = tpu.matmul %26, %27, %cst_13 {dimension_numbers = #tpu.dot_dimension_numbers<[1], [0], [0], [1], [0, 0, 1, 1], [], []>} : vector<8x64xf32>, vector<64x192xf32>, vector<8x192xf32> -> vector<8x192xf32>
    %c0_14 = arith.constant 0 : index
    %c0_15 = arith.constant 0 : index
    %29 = vector.load %arg5[%c0_14, %c0_15] : memref<1x192xf32, #tpu.memory_space<vmem>>, vector<1x192xf32>
    %30 = vector.broadcast %29 : vector<1x192xf32> to vector<8x192xf32>
    %31 = arith.addf %28, %30 : vector<8x192xf32>
    %32 = vector.extract_strided_slice %31 {offsets = [0, 0], sizes = [8, 64], strides = [1, 1]} : vector<8x192xf32> to vector<8x64xf32>
    %cst_16 = arith.constant 5.000000e-01 : f32
    %33 = vector.broadcast %cst_16 : f32 to vector<8x64xf32>
    %34 = arith.mulf %33, %32 : vector<8x64xf32>
    %35 = math.tanh %34 : vector<8x64xf32>
    %cst_17 = arith.constant 1.000000e+00 : f32
    %36 = vector.broadcast %cst_17 : f32 to vector<8x64xf32>
    %37 = arith.addf %35, %36 : vector<8x64xf32>
    %cst_18 = arith.constant 5.000000e-01 : f32
    %38 = vector.broadcast %cst_18 : f32 to vector<8x64xf32>
    %39 = arith.mulf %38, %37 : vector<8x64xf32>
    %40 = vector.extract_strided_slice %31 {offsets = [0, 64], sizes = [8, 64], strides = [1, 1]} : vector<8x192xf32> to vector<8x64xf32>
    %41 = math.tanh %40 : vector<8x64xf32>
    %42 = arith.mulf %39, %41 : vector<8x64xf32>
    %43 = vector.extract_strided_slice %31 {offsets = [0, 128], sizes = [8, 64], strides = [1, 1]} : vector<8x192xf32> to vector<8x64xf32>
    %cst_19 = arith.constant 5.000000e-01 : f32
    %44 = vector.broadcast %cst_19 : f32 to vector<8x64xf32>
    %45 = arith.mulf %44, %43 : vector<8x64xf32>
    %46 = math.tanh %45 : vector<8x64xf32>
    %cst_20 = arith.constant 1.000000e+00 : f32
    %47 = vector.broadcast %cst_20 : f32 to vector<8x64xf32>
    %48 = arith.addf %46, %47 : vector<8x64xf32>
    %cst_21 = arith.constant 5.000000e-01 : f32
    %49 = vector.broadcast %cst_21 : f32 to vector<8x64xf32>
    %50 = arith.mulf %49, %48 : vector<8x64xf32>
    %51 = math.tanh %42 : vector<8x64xf32>
    %52 = arith.mulf %50, %51 : vector<8x64xf32>
    %c0_22 = arith.constant 0 : index
    %c0_23 = arith.constant 0 : index
    %53 = vector.load %arg6[%c0_22, %c0_23] : memref<64x1xf32, #tpu.memory_space<vmem>>, vector<64x1xf32>
    %cst_24 = arith.constant dense<0.000000e+00> : vector<8x1xf32>
    %54 = tpu.matmul %52, %53, %cst_24 {dimension_numbers = #tpu.dot_dimension_numbers<[1], [0], [0], [1], [0, 0, 1, 1], [], []>} : vector<8x64xf32>, vector<64x1xf32>, vector<8x1xf32> -> vector<8x1xf32>
    %c0_25 = arith.constant 0 : index
    %c0_26 = arith.constant 0 : index
    %55 = vector.load %arg7[%c0_25, %c0_26] : memref<1x1xf32, #tpu.memory_space<vmem>>, vector<1x1xf32>
    %56 = vector.broadcast %55 : vector<1x1xf32> to vector<8x1xf32>
    %57 = arith.addf %54, %56 : vector<8x1xf32>
    %cst_27 = arith.constant 5.000000e-01 : f32
    %58 = vector.broadcast %cst_27 : f32 to vector<8x1xf32>
    %59 = arith.mulf %58, %57 : vector<8x1xf32>
    %60 = math.tanh %59 : vector<8x1xf32>
    %cst_28 = arith.constant 1.000000e+00 : f32
    %61 = vector.broadcast %cst_28 : f32 to vector<8x1xf32>
    %62 = arith.addf %60, %61 : vector<8x1xf32>
    %cst_29 = arith.constant 5.000000e-01 : f32
    %63 = vector.broadcast %cst_29 : f32 to vector<8x1xf32>
    %64 = arith.mulf %63, %62 : vector<8x1xf32>
    %c0_30 = arith.constant 0 : index
    %c0_31 = arith.constant 0 : index
    %65 = vector.load %arg8[%c0_30, %c0_31] : memref<8x1xf32, #tpu.memory_space<vmem>>, vector<8x1xf32>
    tpu.vector_store %arg8[%c0_30, %c0_31], %64 {strides = array<i32>} : memref<8x1xf32, #tpu.memory_space<vmem>>, vector<8x1xf32>,
    return
  }
  func.func @transform_0(%arg0: i32) -> (i32, i32) {
    %c0_i32 = arith.constant 0 : i32
    %c0_i32_0 = arith.constant 0 : i32
    return %arg0, %c0_i32 : i32, i32
  }
  func.func @transform_1(%arg0: i32) -> (i32, i32) {
    %c0_i32 = arith.constant 0 : i32
    %c0_i32_0 = arith.constant 0 : i32
    %c0_i32_1 = arith.constant 0 : i32
    return %c0_i32, %c0_i32_0 : i32, i32
  }
  func.func @transform_2(%arg0: i32) -> (i32, i32) {
    %c0_i32 = arith.constant 0 : i32
    %c0_i32_0 = arith.constant 0 : i32
    %c0_i32_1 = arith.constant 0 : i32
    return %c0_i32, %c0_i32_0 : i32, i32
  }
  func.func @transform_3(%arg0: i32) -> (i32, i32) {
    %c0_i32 = arith.constant 0 : i32
    %c0_i32_0 = arith.constant 0 : i32
    %c0_i32_1 = arith.constant 0 : i32
    return %c0_i32, %c0_i32_0 : i32, i32
  }
  func.func @transform_4(%arg0: i32) -> (i32, i32) {
    %c0_i32 = arith.constant 0 : i32
    %c0_i32_0 = arith.constant 0 : i32
    %c0_i32_1 = arith.constant 0 : i32
    return %c0_i32, %c0_i32_0 : i32, i32
  }
  func.func @transform_5(%arg0: i32) -> (i32, i32) {
    %c0_i32 = arith.constant 0 : i32
    %c0_i32_0 = arith.constant 0 : i32
    %c0_i32_1 = arith.constant 0 : i32
    return %c0_i32, %c0_i32_0 : i32, i32
  }
  func.func @transform_6(%arg0: i32) -> (i32, i32) {
    %c0_i32 = arith.constant 0 : i32
    %c0_i32_0 = arith.constant 0 : i32
    %c0_i32_1 = arith.constant 0 : i32
    return %c0_i32, %c0_i32_0 : i32, i32
  }
  func.func @transform_7(%arg0: i32) -> (i32, i32) {
    %c0_i32 = arith.constant 0 : i32
    %c0_i32_0 = arith.constant 0 : i32
    return %arg0, %c0_i32 : i32, i32
  }
}

</mosaic_0001>

<llo_original>
// kernel: tpu_custom_call.1
$region0: #{tpu_custom_call.1}
  #allocation0 [shape = 'u32[]', space=smem, size = 0x4, offset = 0x4, fixed_abs, tag = 'smem constant byte address 0x4 - core index']
  #allocation1 [shape = 'u32[72,128]{1,0:T(1,128)}', space=vmem, size = 0x9000, scoped, tag = 'internal scratch']
  #allocation2 [shape = 'f32[1,1]{1,0:T(1,128)S(1)}', space=vmem, size = 0x200, scoped, tag = 'scoped memory for tpu_custom_call.1']
  %s0 = inlined_call_operand.vmem [shape: f32[8,128], index: 0, kind: input, shape index: {}]
  %s1 = inlined_call_operand.vmem [shape: f32[128,192], index: 1, kind: input, shape index: {}]
  %s2 = inlined_call_operand.vmem [shape: f32[1,192], index: 2, kind: input, shape index: {}]
  %s3 = inlined_call_operand.vmem [shape: f32[64,192], index: 3, kind: input, shape index: {}]
  %s4 = inlined_call_operand.vmem [shape: f32[1,192], index: 4, kind: input, shape index: {}]
  %s5 = inlined_call_operand.vmem [shape: f32[64,1], index: 5, kind: input, shape index: {}]
  %s6 = inlined_call_operand.<no memory space> [shape: f32[1,1], index: 6, kind: input, shape index: {}]
  %s7 = inlined_call_operand.vmem [shape: f32[8,1], index: 7, kind: output, shape index: {}]
  %s8 = sld [smem:[#allocation0]]
  $region38: #{tpu_custom_call.1} parent=0
    _
  %s10 = ssub.s32 1, %s8
  %s11 = scalar_select 0, %s10, %s8
  %v12 = vstv %s6
  %13 = vst [vmem:[#allocation2] sm:$0x1] %v12
  // Predicated region
  $region2: #{tpu_custom_call.1} parent=0 // pred_check
    _
  $region3: #{tpu_custom_call.1} parent=0 // pred_check_branch
    %15 = sbr.rel (0) target = $region5
  $region4: #{tpu_custom_call.1} parent=0 // pred_region
    _
  $region5: #{tpu_custom_call.1} parent=0 // pred_fallthru
    _
  // Predicated region
  $region6: #{tpu_custom_call.1} parent=0 // pred_check
    _
  $region7: #{tpu_custom_call.1} parent=0 // pred_check_branch
    %17 = sbr.rel (0) target = $region9
  $region8: #{tpu_custom_call.1} parent=0 // pred_region
    _
  $region9: #{tpu_custom_call.1} parent=0 // pred_fallthru
    _
  // Predicated region
  $region10: #{tpu_custom_call.1} parent=0 // pred_check
    _
  $region11: #{tpu_custom_call.1} parent=0 // pred_check_branch
    %19 = sbr.rel (0) target = $region13
  $region12: #{tpu_custom_call.1} parent=0 // pred_region
    _
  $region13: #{tpu_custom_call.1} parent=0 // pred_fallthru
    _
  // Predicated region
  $region14: #{tpu_custom_call.1} parent=0 // pred_check
    _
  $region15: #{tpu_custom_call.1} parent=0 // pred_check_branch
    %21 = sbr.rel (0) target = $region17
  $region16: #{tpu_custom_call.1} parent=0 // pred_region
    _
  $region17: #{tpu_custom_call.1} parent=0 // pred_fallthru
    _
  // Predicated region
  $region18: #{tpu_custom_call.1} parent=0 // pred_check
    _
  $region19: #{tpu_custom_call.1} parent=0 // pred_check_branch
    %23 = sbr.rel (0) target = $region21
  $region20: #{tpu_custom_call.1} parent=0 // pred_region
    _
  $region21: #{tpu_custom_call.1} parent=0 // pred_fallthru
    _
  // Predicated region
  $region22: #{tpu_custom_call.1} parent=0 // pred_check
    _
  $region23: #{tpu_custom_call.1} parent=0 // pred_check_branch
    %25 = sbr.rel (0) target = $region25
  $region24: #{tpu_custom_call.1} parent=0 // pred_region
    _
  $region25: #{tpu_custom_call.1} parent=0 // pred_fallthru
    _
  // Predicated region
  $region26: #{tpu_custom_call.1} parent=0 // pred_check
    _
  $region27: #{tpu_custom_call.1} parent=0 // pred_check_branch
    %27 = sbr.rel (0) target = $region29
  $region28: #{tpu_custom_call.1} parent=0 // pred_region
    _
  $region29: #{tpu_custom_call.1} parent=0 // pred_fallthru
    _
  %v28 = vld [vmem:[%s0] sm:$0xff]
  %v29 = vld [vmem:[%s1] sm:$0xff]
  %v30 = vld [vmem:[%s1 + $0x8] sm:$0xff]
  %v31 = vld [vmem:[%s1 + $0x10] sm:$0xff]
  %v32 = vld [vmem:[%s1 + $0x18] sm:$0xff]
  %v33 = vld [vmem:[%s1 + $0x20] sm:$0xff]
  %v34 = vld [vmem:[%s1 + $0x28] sm:$0xff]
  %v35 = vld [vmem:[%s1 + $0x30] sm:$0xff]
  %v36 = vld [vmem:[%s1 + $0x38] sm:$0xff]
  %v37 = vld [vmem:[%s1 + $0x40] sm:$0xff]
  %v38 = vld [vmem:[%s1 + $0x48] sm:$0xff]
  %v39 = vld [vmem:[%s1 + $0x50] sm:$0xff]
  %v40 = vld [vmem:[%s1 + $0x58] sm:$0xff]
  %v41 = vld [vmem:[%s1 + $0x60] sm:$0xff]
  %v42 = vld [vmem:[%s1 + $0x68] sm:$0xff]
  %v43 = vld [vmem:[%s1 + $0x70] sm:$0xff]
  %v44 = vld [vmem:[%s1 + $0x78] sm:$0xff]
  %v45 = vld [vmem:[%s1 + $0x80] sm:$0xff]
  %v46 = vld [vmem:[%s1 + $0x88] sm:$0xff]
  %v47 = vld [vmem:[%s1 + $0x90] sm:$0xff]
  %v48 = vld [vmem:[%s1 + $0x98] sm:$0xff]
  %v49 = vld [vmem:[%s1 + $0xa0] sm:$0xff]
  %v50 = vld [vmem:[%s1 + $0xa8] sm:$0xff]
  %v51 = vld [vmem:[%s1 + $0xb0] sm:$0xff]
  %v52 = vld [vmem:[%s1 + $0xb8] sm:$0xff]
  %v53 = vld [vmem:[%s1 + $0xc0] sm:$0xff]
  %v54 = vld [vmem:[%s1 + $0xc8] sm:$0xff]
  %v55 = vld [vmem:[%s1 + $0xd0] sm:$0xff]
  %v56 = vld [vmem:[%s1 + $0xd8] sm:$0xff]
  %v57 = vld [vmem:[%s1 + $0xe0] sm:$0xff]
  %v58 = vld [vmem:[%s1 + $0xe8] sm:$0xff]
  %v59 = vld [vmem:[%s1 + $0xf0] sm:$0xff]
  %v60 = vld [vmem:[%s1 + $0xf8] sm:$0xff]
  %v61 = vld [vmem:[%s2] sm:$0x3]
  %v63 = vperm.slane %v61, 0
  %v64 = vperm.slane %v61, 1
  %67 = vmatpush.msra.mxu0 %v59
  %68 = vmatpush.msra.mxu0 %v57
  %69 = vmatpush.msra.mxu0 %v55
  %70 = vmatpush.msra.mxu0 %v53
  %71 = vmatpush.msra.mxu0 %v51
  %72 = vmatpush.msra.mxu0 %v49
  %73 = vmatpush.msra.mxu0 %v47
  %74 = vmatpush.msra.mxu0 %v45
  %75 = vmatpush.msra.mxu0 %v43
  %76 = vmatpush.msra.mxu0 %v41
  %77 = vmatpush.msra.mxu0 %v39
  %78 = vmatpush.msra.mxu0 %v37
  %79 = vmatpush.msra.mxu0 %v35
  %80 = vmatpush.msra.mxu0 %v33
  %81 = vmatpush.msra.mxu0 %v31
  %82 = vmatpush.msra.mxu0 %v29
  %83 = vmatmul.f32.gmra.mxu0 %v28
  %v84 = vpop.f32.mrf.mxu0
  %v85 = vadd.f32 %v63, %v84
  %86 = vdwg.mxu0
  %87 = vmatpush.msra.mxu0 %v60
  %88 = vmatpush.msra.mxu0 %v58
  %89 = vmatpush.msra.mxu0 %v56
  %90 = vmatpush.msra.mxu0 %v54
  %91 = vmatpush.msra.mxu0 %v52
  %92 = vmatpush.msra.mxu0 %v50
  %93 = vmatpush.msra.mxu0 %v48
  %94 = vmatpush.msra.mxu0 %v46
  %95 = vmatpush.msra.mxu0 %v44
  %96 = vmatpush.msra.mxu0 %v42
  %97 = vmatpush.msra.mxu0 %v40
  %98 = vmatpush.msra.mxu0 %v38
  %99 = vmatpush.msra.mxu0 %v36
  %100 = vmatpush.msra.mxu0 %v34
  %101 = vmatpush.msra.mxu0 %v32
  %102 = vmatpush.msra.mxu0 %v30
  %103 = vmatmul.f32.gmra.mxu0 %v28
  %v104 = vpop.f32.mrf.mxu0
  %v105 = vadd.f32 %v64, %v104
  %106 = vdwg.mxu0
  %v107 = vmul.f32 %v85, 0.5
  %v108 = vtanh.pop %v107
  %v109 = vadd.f32 %v108, 1.0
  %v110 = vmul.f32 %v109, 0.5
  %v111 = vtanh.pop %v85
  %113 = vrot.lane.b32.xlu0 %v111, 64
  %v114 = vpop.permute.xlu0 %113
  %v116 = vmul.f32 %v110, %v114
  %v117 = vmul.f32 %v105, 0.5
  %v118 = vtanh.pop %v117
  %v119 = vadd.f32 %v118, 1.0
  %v120 = vmul.f32 %v119, 0.5
  %v121 = vtanh.pop %v116
  %v122 = vmul.f32 %v120, %v121
  %v123 = vld [vmem:[%s3] sm:$0xff]
  %v124 = vld [vmem:[%s3 + $0x8] sm:$0xff]
  %v125 = vld [vmem:[%s3 + $0x10] sm:$0xff]
  %v126 = vld [vmem:[%s3 + $0x18] sm:$0xff]
  %v127 = vld [vmem:[%s3 + $0x20] sm:$0xff]
  %v128 = vld [vmem:[%s3 + $0x28] sm:$0xff]
  %v129 = vld [vmem:[%s3 + $0x30] sm:$0xff]
  %v130 = vld [vmem:[%s3 + $0x38] sm:$0xff]
  %v131 = vld [vmem:[%s3 + $0x40] sm:$0xff]
  %v132 = vld [vmem:[%s3 + $0x48] sm:$0xff]
  %v133 = vld [vmem:[%s3 + $0x50] sm:$0xff]
  %v134 = vld [vmem:[%s3 + $0x58] sm:$0xff]
  %v135 = vld [vmem:[%s3 + $0x60] sm:$0xff]
  %v136 = vld [vmem:[%s3 + $0x68] sm:$0xff]
  %v137 = vld [vmem:[%s3 + $0x70] sm:$0xff]
  %v138 = vld [vmem:[%s3 + $0x78] sm:$0xff]
  %v139 = vld [vmem:[%s4] sm:$0x3]
  %v141 = vperm.slane %v139, 0
  %v142 = vperm.slane %v139, 1
  %vm145 = vcmask 523264
  %v147 = vsel %vm145, %v122, 0
  %149 = vmatpush.msra.mxu0 0.0
  %150 = vmatpush.msra.mxu0 0.0
  %151 = vmatpush.msra.mxu0 0.0
  %152 = vmatpush.msra.mxu0 0.0
  %153 = vmatpush.msra.mxu0 0.0
  %154 = vmatpush.msra.mxu0 0.0
  %155 = vmatpush.msra.mxu0 0.0
  %156 = vmatpush.msra.mxu0 0.0
  %157 = vmatpush.msra.mxu0 %v137
  %158 = vmatpush.msra.mxu0 %v135
  %159 = vmatpush.msra.mxu0 %v133
  %160 = vmatpush.msra.mxu0 %v131
  %161 = vmatpush.msra.mxu0 %v129
  %162 = vmatpush.msra.mxu0 %v127
  %163 = vmatpush.msra.mxu0 %v125
  %164 = vmatpush.msra.mxu0 %v123
  %165 = vmatmul.f32.gmra.mxu0 %v147
  %v166 = vpop.f32.mrf.mxu0
  %v167 = vadd.f32 %v141, %v166
  %168 = vdwg.mxu0
  %169 = vmatpush.msra.mxu0 0.0
  %170 = vmatpush.msra.mxu0 0.0
  %171 = vmatpush.msra.mxu0 0.0
  %172 = vmatpush.msra.mxu0 0.0
  %173 = vmatpush.msra.mxu0 0.0
  %174 = vmatpush.msra.mxu0 0.0
  %175 = vmatpush.msra.mxu0 0.0
  %176 = vmatpush.msra.mxu0 0.0
  %177 = vmatpush.msra.mxu0 %v138
  %178 = vmatpush.msra.mxu0 %v136
  %179 = vmatpush.msra.mxu0 %v134
  %180 = vmatpush.msra.mxu0 %v132
  %181 = vmatpush.msra.mxu0 %v130
  %182 = vmatpush.msra.mxu0 %v128
  %183 = vmatpush.msra.mxu0 %v126
  %184 = vmatpush.msra.mxu0 %v124
  %185 = vmatmul.f32.gmra.mxu0 %v147
  %v186 = vpop.f32.mrf.mxu0
  %v187 = vadd.f32 %v142, %v186
  %188 = vdwg.mxu0
  %v189 = vmul.f32 %v167, 0.5
  %v190 = vtanh.pop %v189
  %v191 = vadd.f32 %v190, 1.0
  %v192 = vmul.f32 %v191, 0.5
  %v193 = vtanh.pop %v167
  %195 = vrot.lane.b32.xlu0 %v193, 64
  %v196 = vpop.permute.xlu0 %195
  %v198 = vmul.f32 %v192, %v196
  %v199 = vmul.f32 %v187, 0.5
  %v200 = vtanh.pop %v199
  %v201 = vadd.f32 %v200, 1.0
  %v202 = vmul.f32 %v201, 0.5
  %v203 = vtanh.pop %v198
  %v204 = vmul.f32 %v202, %v203
  %v205 = vld [vmem:[%s5] sm:$0xff]
  %v206 = vld [vmem:[%s5 + $0x8] sm:$0xff]
  %v207 = vld [vmem:[%s5 + $0x10] sm:$0xff]
  %v208 = vld [vmem:[%s5 + $0x18] sm:$0xff]
  %v209 = vld [vmem:[%s5 + $0x20] sm:$0xff]
  %v210 = vld [vmem:[%s5 + $0x28] sm:$0xff]
  %v211 = vld [vmem:[%s5 + $0x30] sm:$0xff]
  %v212 = vld [vmem:[%s5 + $0x38] sm:$0xff]
  %v213 = vld [vmem:[#allocation2] sm:$0x1]
  %v215 = vperm.slane %v213, 0
  %v218 = vsel %vm145, %v204, 0
  %220 = vmatpush.msra.mxu0 0.0
  %221 = vmatpush.msra.mxu0 0.0
  %222 = vmatpush.msra.mxu0 0.0
  %223 = vmatpush.msra.mxu0 0.0
  %224 = vmatpush.msra.mxu0 0.0
  %225 = vmatpush.msra.mxu0 0.0
  %226 = vmatpush.msra.mxu0 0.0
  %227 = vmatpush.msra.mxu0 0.0
  %228 = vmatpush.msra.mxu0 %v212
  %229 = vmatpush.msra.mxu0 %v211
  %230 = vmatpush.msra.mxu0 %v210
  %231 = vmatpush.msra.mxu0 %v209
  %232 = vmatpush.msra.mxu0 %v208
  %233 = vmatpush.msra.mxu0 %v207
  %234 = vmatpush.msra.mxu0 %v206
  %235 = vmatpush.msra.mxu0 %v205
  %236 = vmatmul.f32.gmra.mxu0 %v218
  %v237 = vpop.f32.mrf.mxu0
  %v238 = vadd.f32 %v215, %v237
  %239 = vdwg.mxu0
  %v240 = vmul.f32 %v238, 0.5
  %v241 = vtanh.pop %v240
  %v242 = vadd.f32 %v241, 1.0
  %v243 = vmul.f32 %v242, 0.5
  %vm244 = vcmask 7168
  %245 = vst.msk [vmem:[%s7] sm:$0xff] %vm244, %v243
  // Predicated region
  $region30: #{tpu_custom_call.1} parent=0 // pred_check
    _
  $region31: #{tpu_custom_call.1} parent=0 // pred_check_branch
    %247 = sbr.rel (0) target = $region33
  $region32: #{tpu_custom_call.1} parent=0 // pred_region
    _
  $region33: #{tpu_custom_call.1} parent=0 // pred_fallthru
    _
  // Predicated region
  $region34: #{tpu_custom_call.1} parent=0 // pred_check
    _
  $region35: #{tpu_custom_call.1} parent=0 // pred_check_branch
    %249 = sbr.rel (0) target = $region37
  $region36: #{tpu_custom_call.1} parent=0 // pred_region
    _
  $region37: #{tpu_custom_call.1} parent=0 // pred_fallthru
    _

</llo_original>
